<compile_context>
chip_gen: v6e
topology: v6e:2x2x1
jax: 0.10.0
libtpu: 0.0.40
codegen_flags: <defaults>
</compile_context>

<pallas_src>
import numpy as np
import jax
import jax.numpy as jnp
from jax import lax
from jax.experimental import pallas as pl
from jax.experimental.pallas import tpu as pltpu

KH = KW = 3  # all fixed kernels are 3x3


# ----------------------------------------------------------------------------
# Deterministic fixed kernels (stand-in for kernels_all, 5 kinds x 2 kernels).
# The original repo populates kernels_all elsewhere; values here are classic
# fixed filters, defined deterministically in-script.
# ----------------------------------------------------------------------------
def _build_fixed_kernels():
    k = {}
    k[1] = {
        "center": [[0, 0, 0], [0, 1, 0], [0, 0, 0]],
        "box": [[1.0 / 9.0] * 3] * 3,
    }
    k[2] = {
        "sobel_x": [[-1, 0, 1], [-2, 0, 2], [-1, 0, 1]],
        "sobel_y": [[-1, -2, -1], [0, 0, 0], [1, 2, 1]],
    }
    k[3] = {
        "prewitt_x": [[-1, 0, 1], [-1, 0, 1], [-1, 0, 1]],
        "prewitt_y": [[-1, -1, -1], [0, 0, 0], [1, 1, 1]],
    }
    k[4] = {
        "laplacian4": [[0, 1, 0], [1, -4, 1], [0, 1, 0]],
        "laplacian8": [[1, 1, 1], [1, -8, 1], [1, 1, 1]],
    }
    k[5] = {
        "emboss": [[-2, -1, 0], [-1, 1, 1], [0, 1, 2]],
        "sharpen": [[0, -1, 0], [-1, 5, -1], [0, -1, 0]],
    }
    return k


kernels_all = _build_fixed_kernels()


def get_kernels(kind):
    return list(kernels_all[kind].values())


def build_weight_stack():
    """Mirror FENetwFW.__init__: flatten all kernels of kinds 1..5 -> (K, 3, 3).

    The weights are fixed (requires_grad=False), so they are baked into the
    Pallas kernel as compile-time constants.
    """
    kernels = [get_kernels(i) for i in range(1, 6)]
    flat = [np.asarray(k, dtype=np.float32) for ks in kernels for k in ks]
    return np.stack(flat, axis=0)  # (K, 3, 3), K = 10


def _tap_lists(wnp):
    """Per-filter list of non-zero taps (di, dj, weight) — compile-time."""
    K = wnp.shape[0]
    taps = []
    for k in range(K):
        t = []
        for di in range(KH):
            for dj in range(KW):
                w = float(wnp[k, di, dj])
                if w != 0.0:
                    t.append((di, dj, w))
        taps.append(t)
    return taps


def _accumulate(win, taps_k, like):
    """Constant-folded weighted sum of shifted windows (VPU adds/subs)."""
    acc = None
    for (di, dj, w) in taps_k:
        v = win[(di, dj)]
        if acc is None:
            acc = v if w == 1.0 else (-v if w == -1.0 else w * v)
        elif w == 1.0:
            acc = acc + v
        elif w == -1.0:
            acc = acc - v
        else:
            acc = acc + w * v
    return acc if acc is not None else jnp.zeros_like(like)


# ----------------------------------------------------------------------------
# Flat (lane-dense) kernel: works on whole images flattened to length L = H*W,
# requires L % 128 == 0.  Output block is (NB, (K+1)*L): channel c lives at
# lane offset c*L (a multiple of 128 -> aligned, unmasked full-width stores).
# ----------------------------------------------------------------------------
def _make_flat_kernel(wnp, NB, H, W):
    K = wnp.shape[0]
    L = H * W
    taps = _tap_lists(wnp)

    def kernel(x_ref, out_ref):
        f32 = jnp.float32
        x = x_ref[...]  # (NB, L), lane-dense

        # Column-boundary masks (j == 0 / j == W-1), hoisted once per grid step.
        # Built with exact f32 math (exact for any L that fits VMEM anyway),
        # avoiding vector integer div/rem.
        p = lax.broadcasted_iota(jnp.int32, (1, L), 1).astype(f32)
        j = p - jnp.floor(p / float(W)) * float(W)          # j = p mod W
        has_left = j >= 0.5                                  # j != 0
        has_right = j <= float(W - 1) - 0.5                  # j != W-1

        # 'same'-padded shifted windows in the flattened row-major layout.
        #   horizontal +-1  == flat shift by +-1, masked at row boundaries
        #   vertical   +-1  == flat shift by +-W, zero fill == zero padding
        # Explicit concat-of-slices keeps the shift direction unambiguous; it
        # lowers to the same XLU lane shifts a pltpu.roll variant would use.
        z1 = jnp.zeros((NB, 1), f32)
        zW = jnp.zeros((NB, W), f32)
        xl = jnp.where(has_left, jnp.concatenate([z1, x[:, : L - 1]], axis=1), 0.0)
        xr = jnp.where(has_right, jnp.concatenate([x[:, 1:], z1], axis=1), 0.0)
        cols = (xl, x, xr)

        win = {}
        for dj in range(KW):
            c = cols[dj]
            win[(0, dj)] = jnp.concatenate([zW, c[:, : L - W]], axis=1)  # row i-1
            win[(1, dj)] = c                                             # row i
            win[(2, dj)] = jnp.concatenate([c[:, W:], zW], axis=1)       # row i+1

        # Channel 0: input passthrough.  Interleave compute and store per
        # channel so peak VMEM holds ~1 accumulator instead of K+1 full maps.
        out_ref[:, 0:L] = x.astype(out_ref.dtype)
        for k in range(K):
            acc = _accumulate(win, taps[k], x)
            out_ref[:, (k + 1) * L:(k + 2) * L] = acc.astype(out_ref.dtype)

    return kernel


# ----------------------------------------------------------------------------
# Plain fallback kernel (H*W not a multiple of 128): (NB, H, W) layout.
# ----------------------------------------------------------------------------
def _make_plain_kernel(wnp, NB, H, W):
    K = wnp.shape[0]
    taps = _tap_lists(wnp)

    def kernel(x_ref, out_ref):
        f32 = jnp.float32
        x = x_ref[...]  # (NB, H, W)
        zrow = jnp.zeros((NB, 1, W), f32)
        zcol = jnp.zeros((NB, H, 1), f32)
        xl = jnp.concatenate([zcol, x[:, :, : W - 1]], axis=2)
        xr = jnp.concatenate([x[:, :, 1:], zcol], axis=2)
        cols = (xl, x, xr)

        win = {}
        for dj in range(KW):
            c = cols[dj]
            win[(0, dj)] = jnp.concatenate([zrow, c[:, : H - 1, :]], axis=1)
            win[(1, dj)] = c
            win[(2, dj)] = jnp.concatenate([c[:, 1:, :], zrow], axis=1)

        out_ref[:, 0, :, :] = x.astype(out_ref.dtype)
        for k in range(K):
            acc = _accumulate(win, taps[k], x)
            out_ref[:, k + 1, :, :] = acc.astype(out_ref.dtype)

    return kernel


# ----------------------------------------------------------------------------
# VMEM budget / batch-block selection
# ----------------------------------------------------------------------------
def _vmem_budget_bytes():
    """Per-generation scoped-VMEM budget, passed as vmem_limit_bytes."""
    try:
        kind = jax.devices()[0].device_kind.lower()
    except Exception:  # noqa: BLE001 - hardware sniff only; fall back to safe default
        kind = ""
    if "v7" in kind:
        return 44 << 20   # v7x: 64 MiB physical per TensorCore -> leave headroom
    if "v2" in kind or "v3" in kind:
        return 12 << 20   # older gens: stay near the default scoped limit
    return 64 << 20       # v4/v5e/v6e: 128 MiB physical VMEM


def _pick_batch_block(N, L, K, budget_bytes, require_mult8):
    """Images per grid step.

    Working-set model (bytes/image/step): double-buffered input block (2x) +
    double-buffered (K+1)-channel output block (2*(K+1)x) + in-kernel shifted
    windows / accumulator temporaries (~14x), each L*4 bytes.
    Prefers >= 4 grid steps when possible so the output writeback of step i-1
    overlaps step i compute (and both v7x TensorCores get work).
    """
    per_img = 4 * L * (2 + 2 * (K + 1) + 14)
    cap = max(1, budget_bytes // per_img)
    if require_mult8:
        # (NB, L) blocks: second-to-last block dim must be a multiple of 8 or
        # equal the full array dim.
        cands = [d for d in range(1, N + 1) if N % d == 0 and (d == N or d % 8 == 0)]
    else:
        cands = [d for d in range(1, N + 1) if N % d == 0]
    fitting = [d for d in cands if d <= cap] or [min(cands)]
    deep = [d for d in fitting if N // d >= 4]
    pool = deep or fitting
    return max(pool)


# ----------------------------------------------------------------------------
# Forward wrapper
# ----------------------------------------------------------------------------
def fenet_forward(img, weights, out_dtype=jnp.float32, batch_block=None):
    """img: (N, 1, H, W), weights: fixed (K, 3, 3) -> (N, K+1, H, W)."""
    wnp = np.asarray(weights, dtype=np.float32)
    N, C, H, W = img.shape
    assert C == 1, "FENetwFW fixed kernels are single-input-channel"
    K = wnp.shape[0]
    L = H * W

    budget = _vmem_budget_bytes()
    cparams = pltpu.CompilerParams(
        dimension_semantics=("parallel",),
        vmem_limit_bytes=int(budget),
    )

    # Static layout choice: lane-dense flattened layout whenever H*W % 128 == 0.
    if L % 128 == 0:
        NB = batch_block if batch_block is not None else _pick_batch_block(
            N, L, K, budget, require_mult8=True)
        assert N % NB == 0 and (NB == N or NB % 8 == 0)
        x = jnp.asarray(img, jnp.float32).reshape(N, L)      # contiguous squeeze
        kernel = _make_flat_kernel(wnp, NB, H, W)

        @jax.jit
        def run(xx):
            out = pl.pallas_call(
                kernel,
                out_shape=jax.ShapeDtypeStruct((N, (K + 1) * L), out_dtype),
                grid=(N // NB,),
                in_specs=[pl.BlockSpec((NB, L), lambda b: (b, 0))],
                out_specs=pl.BlockSpec((NB, (K + 1) * L), lambda b: (b, 0)),
                compiler_params=cparams,
            )(xx)
            # Contiguous reshape back to NCHW (channel-major then row-major).
            return out.reshape(N, K + 1, H, W)

        return run(x)

    # Fallback: plain (NB, H, W) layout (partial-lane stores when W % 128 != 0).
    NB = batch_block if batch_block is not None else _pick_batch_block(
        N, L, K, budget, require_mult8=False)
    assert N % NB == 0
    x = jnp.asarray(img, jnp.float32).reshape(N, H, W)
    kernel = _make_plain_kernel(wnp, NB, H, W)

    @jax.jit
    def run_plain(xx):
        return pl.pallas_call(
            kernel,
            out_shape=jax.ShapeDtypeStruct((N, K + 1, H, W), out_dtype),
            grid=(N // NB,),
            in_specs=[pl.BlockSpec((NB, H, W), lambda b: (b, 0, 0))],
            out_specs=pl.BlockSpec((NB, K + 1, H, W), lambda b: (b, 0, 0, 0)),
            compiler_params=cparams,
        )(xx)

    return run_plain(x)


# ----------------------------------------------------------------------------
# Pure-JAX reference (correctness check only)
# ----------------------------------------------------------------------------
def fenet_reference(img, weights):
    wnp = np.asarray(weights, dtype=np.float32)
    N, C, H, W = img.shape
    x = jnp.asarray(img[:, 0], jnp.float32)
    xpad = jnp.pad(x, ((0, 0), (1, 1), (1, 1)))
    maps = [x]
    for k in range(wnp.shape[0]):
        acc = jnp.zeros((N, H, W), jnp.float32)
        for di in range(KH):
            for dj in range(KW):
                acc = acc + float(wnp[k, di, dj]) * xpad[:, di:di + H, dj:dj + W]
        maps.append(acc)
    return jnp.stack(maps, axis=1)


if __name__ == "__main__":
    key = jax.random.PRNGKey(0)
    N, C, H, W = 2, 1, 16, 16
    img = jax.random.normal(key, (N, C, H, W), dtype=jnp.float32)

    weights = build_weight_stack()  # (10, 3, 3) fixed filters

    out = fenet_forward(img, weights)
    out = jax.block_until_ready(out)

    ref = fenet_reference(img, weights)
    assert out.shape == (N, weights.shape[0] + 1, H, W)
    np.testing.assert_allclose(np.asarray(out), np.asarray(ref),
                               rtol=1e-5, atol=1e-5)

    print("KERNEL_OK")
</pallas_src>

<mosaic_0001>
module attributes {stable_mosaic.version = 11 : i64} {
  func.func @kernel(%arg0: i32, %arg1: memref<2x256xf32, #tpu.memory_space<vmem>>, %arg2: memref<2x2816xf32, #tpu.memory_space<vmem>>) attributes {dimension_semantics = [#tpu.dimension_semantics<parallel>], iteration_bounds = array<i64: 1>, scalar_prefetch = 0 : i64, scratch_operands = 0 : i64, tpu.core_type = #tpu.core_type<tc>, window_params = [{transform_indices = @transform_0, window_bounds = array<i64: 2, 256>}, {transform_indices = @transform_1, window_bounds = array<i64: 2, 2816>}]} {
    %c0 = arith.constant 0 : index
    %c0_0 = arith.constant 0 : index
    %0 = vector.load %arg1[%c0, %c0_0] : memref<2x256xf32, #tpu.memory_space<vmem>>, vector<2x256xf32>
    %1 = tpu.iota {dimensions = array<i32: 1>} : vector<1x256xi32>
    %2 = arith.sitofp %1 : vector<1x256xi32> to vector<1x256xf32>
    %cst = arith.constant 1.600000e+01 : f32
    %3 = vector.broadcast %cst : f32 to vector<1x256xf32>
    %4 = arith.divf %2, %3 : vector<1x256xf32>
    %5 = math.floor %4 : vector<1x256xf32>
    %cst_1 = arith.constant 1.600000e+01 : f32
    %6 = vector.broadcast %cst_1 : f32 to vector<1x256xf32>
    %7 = arith.mulf %5, %6 : vector<1x256xf32>
    %8 = arith.subf %2, %7 : vector<1x256xf32>
    %cst_2 = arith.constant 5.000000e-01 : f32
    %9 = vector.broadcast %cst_2 : f32 to vector<1x256xf32>
    %10 = arith.cmpf oge, %8, %9 : vector<1x256xf32>
    %cst_3 = arith.constant 1.450000e+01 : f32
    %11 = vector.broadcast %cst_3 : f32 to vector<1x256xf32>
    %12 = arith.cmpf ole, %8, %11 : vector<1x256xf32>
    %cst_4 = arith.constant 0.000000e+00 : f32
    %13 = vector.broadcast %cst_4 : f32 to vector<2x1xf32>
    %cst_5 = arith.constant 0.000000e+00 : f32
    %14 = vector.broadcast %cst_5 : f32 to vector<2x16xf32>
    %15 = vector.extract_strided_slice %0 {offsets = [0, 0], sizes = [2, 255], strides = [1, 1]} : vector<2x256xf32> to vector<2x255xf32>
    %16 = tpu.concatenate %13, %15 in 1 : vector<2x1xf32>, vector<2x255xf32> -> vector<2x256xf32>
    %cst_6 = arith.constant 0.000000e+00 : f32
    %17 = vector.shape_cast %10 : vector<1x256xi1> to vector<1x256xi1>
    %18 = vector.broadcast %17 : vector<1x256xi1> to vector<2x256xi1>
    %19 = vector.broadcast %cst_6 : f32 to vector<2x256xf32>
    %20 = arith.select %18, %16, %19 : vector<2x256xi1>, vector<2x256xf32>
    %21 = vector.extract_strided_slice %0 {offsets = [0, 1], sizes = [2, 255], strides = [1, 1]} : vector<2x256xf32> to vector<2x255xf32>
    %22 = tpu.concatenate %21, %13 in 1 : vector<2x255xf32>, vector<2x1xf32> -> vector<2x256xf32>
    %cst_7 = arith.constant 0.000000e+00 : f32
    %23 = vector.shape_cast %12 : vector<1x256xi1> to vector<1x256xi1>
    %24 = vector.broadcast %23 : vector<1x256xi1> to vector<2x256xi1>
    %25 = vector.broadcast %cst_7 : f32 to vector<2x256xf32>
    %26 = arith.select %24, %22, %25 : vector<2x256xi1>, vector<2x256xf32>
    %27 = vector.extract_strided_slice %20 {offsets = [0, 0], sizes = [2, 240], strides = [1, 1]} : vector<2x256xf32> to vector<2x240xf32>
    %28 = tpu.concatenate %14, %27 in 1 : vector<2x16xf32>, vector<2x240xf32> -> vector<2x256xf32>
    %29 = vector.extract_strided_slice %20 {offsets = [0, 16], sizes = [2, 240], strides = [1, 1]} : vector<2x256xf32> to vector<2x240xf32>
    %30 = tpu.concatenate %29, %14 in 1 : vector<2x240xf32>, vector<2x16xf32> -> vector<2x256xf32>
    %31 = vector.extract_strided_slice %0 {offsets = [0, 0], sizes = [2, 240], strides = [1, 1]} : vector<2x256xf32> to vector<2x240xf32>
    %32 = tpu.concatenate %14, %31 in 1 : vector<2x16xf32>, vector<2x240xf32> -> vector<2x256xf32>
    %33 = vector.extract_strided_slice %0 {offsets = [0, 16], sizes = [2, 240], strides = [1, 1]} : vector<2x256xf32> to vector<2x240xf32>
    %34 = tpu.concatenate %33, %14 in 1 : vector<2x240xf32>, vector<2x16xf32> -> vector<2x256xf32>
    %35 = vector.extract_strided_slice %26 {offsets = [0, 0], sizes = [2, 240], strides = [1, 1]} : vector<2x256xf32> to vector<2x240xf32>
    %36 = tpu.concatenate %14, %35 in 1 : vector<2x16xf32>, vector<2x240xf32> -> vector<2x256xf32>
    %37 = vector.extract_strided_slice %26 {offsets = [0, 16], sizes = [2, 240], strides = [1, 1]} : vector<2x256xf32> to vector<2x240xf32>
    %38 = tpu.concatenate %37, %14 in 1 : vector<2x240xf32>, vector<2x16xf32> -> vector<2x256xf32>
    %c0_8 = arith.constant 0 : index
    %c0_9 = arith.constant 0 : index
    %39 = vector.load %arg2[%c0_8, %c0_9] : memref<2x2816xf32, #tpu.memory_space<vmem>>, vector<2x256xf32>
    tpu.vector_store %arg2[%c0_8, %c0_9], %0 {strides = array<i32>} : memref<2x2816xf32, #tpu.memory_space<vmem>>, vector<2x256xf32>,
    %c0_10 = arith.constant 0 : index
    %c256 = arith.constant 256 : index
    %40 = vector.load %arg2[%c0_10, %c256] : memref<2x2816xf32, #tpu.memory_space<vmem>>, vector<2x256xf32>
    tpu.vector_store %arg2[%c0_10, %c256], %0 {strides = array<i32>} : memref<2x2816xf32, #tpu.memory_space<vmem>>, vector<2x256xf32>,
    %cst_11 = arith.constant 0.111111112 : f32
    %41 = vector.broadcast %cst_11 : f32 to vector<2x256xf32>
    %42 = arith.mulf %41, %28 : vector<2x256xf32>
    %cst_12 = arith.constant 0.111111112 : f32
    %43 = vector.broadcast %cst_12 : f32 to vector<2x256xf32>
    %44 = arith.mulf %43, %32 : vector<2x256xf32>
    %45 = arith.addf %42, %44 : vector<2x256xf32>
    %cst_13 = arith.constant 0.111111112 : f32
    %46 = vector.broadcast %cst_13 : f32 to vector<2x256xf32>
    %47 = arith.mulf %46, %36 : vector<2x256xf32>
    %48 = arith.addf %45, %47 : vector<2x256xf32>
    %cst_14 = arith.constant 0.111111112 : f32
    %49 = vector.broadcast %cst_14 : f32 to vector<2x256xf32>
    %50 = arith.mulf %49, %20 : vector<2x256xf32>
    %51 = arith.addf %48, %50 : vector<2x256xf32>
    %cst_15 = arith.constant 0.111111112 : f32
    %52 = vector.broadcast %cst_15 : f32 to vector<2x256xf32>
    %53 = arith.mulf %52, %0 : vector<2x256xf32>
    %54 = arith.addf %51, %53 : vector<2x256xf32>
    %cst_16 = arith.constant 0.111111112 : f32
    %55 = vector.broadcast %cst_16 : f32 to vector<2x256xf32>
    %56 = arith.mulf %55, %26 : vector<2x256xf32>
    %57 = arith.addf %54, %56 : vector<2x256xf32>
    %cst_17 = arith.constant 0.111111112 : f32
    %58 = vector.broadcast %cst_17 : f32 to vector<2x256xf32>
    %59 = arith.mulf %58, %30 : vector<2x256xf32>
    %60 = arith.addf %57, %59 : vector<2x256xf32>
    %cst_18 = arith.constant 0.111111112 : f32
    %61 = vector.broadcast %cst_18 : f32 to vector<2x256xf32>
    %62 = arith.mulf %61, %34 : vector<2x256xf32>
    %63 = arith.addf %60, %62 : vector<2x256xf32>
    %cst_19 = arith.constant 0.111111112 : f32
    %64 = vector.broadcast %cst_19 : f32 to vector<2x256xf32>
    %65 = arith.mulf %64, %38 : vector<2x256xf32>
    %66 = arith.addf %63, %65 : vector<2x256xf32>
    %c0_20 = arith.constant 0 : index
    %c512 = arith.constant 512 : index
    %67 = vector.load %arg2[%c0_20, %c512] : memref<2x2816xf32, #tpu.memory_space<vmem>>, vector<2x256xf32>
    tpu.vector_store %arg2[%c0_20, %c512], %66 {strides = array<i32>} : memref<2x2816xf32, #tpu.memory_space<vmem>>, vector<2x256xf32>,
    %cst_21 = arith.constant 0.000000e+00 : f32
    %68 = vector.broadcast %cst_21 : f32 to vector<2x256xf32>
    %69 = arith.subf %68, %28 : vector<2x256xf32>
    %70 = arith.addf %69, %36 : vector<2x256xf32>
    %cst_22 = arith.constant -2.000000e+00 : f32
    %71 = vector.broadcast %cst_22 : f32 to vector<2x256xf32>
    %72 = arith.mulf %71, %20 : vector<2x256xf32>
    %73 = arith.addf %70, %72 : vector<2x256xf32>
    %cst_23 = arith.constant 2.000000e+00 : f32
    %74 = vector.broadcast %cst_23 : f32 to vector<2x256xf32>
    %75 = arith.mulf %74, %26 : vector<2x256xf32>
    %76 = arith.addf %73, %75 : vector<2x256xf32>
    %77 = arith.subf %76, %30 : vector<2x256xf32>
    %78 = arith.addf %77, %38 : vector<2x256xf32>
    %c0_24 = arith.constant 0 : index
    %c768 = arith.constant 768 : index
    %79 = vector.load %arg2[%c0_24, %c768] : memref<2x2816xf32, #tpu.memory_space<vmem>>, vector<2x256xf32>
    tpu.vector_store %arg2[%c0_24, %c768], %78 {strides = array<i32>} : memref<2x2816xf32, #tpu.memory_space<vmem>>, vector<2x256xf32>,
    %cst_25 = arith.constant 0.000000e+00 : f32
    %80 = vector.broadcast %cst_25 : f32 to vector<2x256xf32>
    %81 = arith.subf %80, %28 : vector<2x256xf32>
    %cst_26 = arith.constant -2.000000e+00 : f32
    %82 = vector.broadcast %cst_26 : f32 to vector<2x256xf32>
    %83 = arith.mulf %82, %32 : vector<2x256xf32>
    %84 = arith.addf %81, %83 : vector<2x256xf32>
    %85 = arith.subf %84, %36 : vector<2x256xf32>
    %86 = arith.addf %85, %30 : vector<2x256xf32>
    %cst_27 = arith.constant 2.000000e+00 : f32
    %87 = vector.broadcast %cst_27 : f32 to vector<2x256xf32>
    %88 = arith.mulf %87, %34 : vector<2x256xf32>
    %89 = arith.addf %86, %88 : vector<2x256xf32>
    %90 = arith.addf %89, %38 : vector<2x256xf32>
    %c0_28 = arith.constant 0 : index
    %c1024 = arith.constant 1024 : index
    %91 = vector.load %arg2[%c0_28, %c1024] : memref<2x2816xf32, #tpu.memory_space<vmem>>, vector<2x256xf32>
    tpu.vector_store %arg2[%c0_28, %c1024], %90 {strides = array<i32>} : memref<2x2816xf32, #tpu.memory_space<vmem>>, vector<2x256xf32>,
    %cst_29 = arith.constant 0.000000e+00 : f32
    %92 = vector.broadcast %cst_29 : f32 to vector<2x256xf32>
    %93 = arith.subf %92, %28 : vector<2x256xf32>
    %94 = arith.addf %93, %36 : vector<2x256xf32>
    %95 = arith.subf %94, %20 : vector<2x256xf32>
    %96 = arith.addf %95, %26 : vector<2x256xf32>
    %97 = arith.subf %96, %30 : vector<2x256xf32>
    %98 = arith.addf %97, %38 : vector<2x256xf32>
    %c0_30 = arith.constant 0 : index
    %c1280 = arith.constant 1280 : index
    %99 = vector.load %arg2[%c0_30, %c1280] : memref<2x2816xf32, #tpu.memory_space<vmem>>, vector<2x256xf32>
    tpu.vector_store %arg2[%c0_30, %c1280], %98 {strides = array<i32>} : memref<2x2816xf32, #tpu.memory_space<vmem>>, vector<2x256xf32>,
    %cst_31 = arith.constant 0.000000e+00 : f32
    %100 = vector.broadcast %cst_31 : f32 to vector<2x256xf32>
    %101 = arith.subf %100, %28 : vector<2x256xf32>
    %102 = arith.subf %101, %32 : vector<2x256xf32>
    %103 = arith.subf %102, %36 : vector<2x256xf32>
    %104 = arith.addf %103, %30 : vector<2x256xf32>
    %105 = arith.addf %104, %34 : vector<2x256xf32>
    %106 = arith.addf %105, %38 : vector<2x256xf32>
    %c0_32 = arith.constant 0 : index
    %c1536 = arith.constant 1536 : index
    %107 = vector.load %arg2[%c0_32, %c1536] : memref<2x2816xf32, #tpu.memory_space<vmem>>, vector<2x256xf32>
    tpu.vector_store %arg2[%c0_32, %c1536], %106 {strides = array<i32>} : memref<2x2816xf32, #tpu.memory_space<vmem>>, vector<2x256xf32>,
    %108 = arith.addf %32, %20 : vector<2x256xf32>
    %cst_33 = arith.constant -4.000000e+00 : f32
    %109 = vector.broadcast %cst_33 : f32 to vector<2x256xf32>
    %110 = arith.mulf %109, %0 : vector<2x256xf32>
    %111 = arith.addf %108, %110 : vector<2x256xf32>
    %112 = arith.addf %111, %26 : vector<2x256xf32>
    %113 = arith.addf %112, %34 : vector<2x256xf32>
    %c0_34 = arith.constant 0 : index
    %c1792 = arith.constant 1792 : index
    %114 = vector.load %arg2[%c0_34, %c1792] : memref<2x2816xf32, #tpu.memory_space<vmem>>, vector<2x256xf32>
    tpu.vector_store %arg2[%c0_34, %c1792], %113 {strides = array<i32>} : memref<2x2816xf32, #tpu.memory_space<vmem>>, vector<2x256xf32>,
    %115 = arith.addf %28, %32 : vector<2x256xf32>
    %116 = arith.addf %115, %36 : vector<2x256xf32>
    %117 = arith.addf %116, %20 : vector<2x256xf32>
    %cst_35 = arith.constant -8.000000e+00 : f32
    %118 = vector.broadcast %cst_35 : f32 to vector<2x256xf32>
    %119 = arith.mulf %118, %0 : vector<2x256xf32>
    %120 = arith.addf %117, %119 : vector<2x256xf32>
    %121 = arith.addf %120, %26 : vector<2x256xf32>
    %122 = arith.addf %121, %30 : vector<2x256xf32>
    %123 = arith.addf %122, %34 : vector<2x256xf32>
    %124 = arith.addf %123, %38 : vector<2x256xf32>
    %c0_36 = arith.constant 0 : index
    %c2048 = arith.constant 2048 : index
    %125 = vector.load %arg2[%c0_36, %c2048] : memref<2x2816xf32, #tpu.memory_space<vmem>>, vector<2x256xf32>
    tpu.vector_store %arg2[%c0_36, %c2048], %124 {strides = array<i32>} : memref<2x2816xf32, #tpu.memory_space<vmem>>, vector<2x256xf32>,
    %cst_37 = arith.constant -2.000000e+00 : f32
    %126 = vector.broadcast %cst_37 : f32 to vector<2x256xf32>
    %127 = arith.mulf %126, %28 : vector<2x256xf32>
    %128 = arith.subf %127, %32 : vector<2x256xf32>
    %129 = arith.subf %128, %20 : vector<2x256xf32>
    %130 = arith.addf %129, %0 : vector<2x256xf32>
    %131 = arith.addf %130, %26 : vector<2x256xf32>
    %132 = arith.addf %131, %34 : vector<2x256xf32>
    %cst_38 = arith.constant 2.000000e+00 : f32
    %133 = vector.broadcast %cst_38 : f32 to vector<2x256xf32>
    %134 = arith.mulf %133, %38 : vector<2x256xf32>
    %135 = arith.addf %132, %134 : vector<2x256xf32>
    %c0_39 = arith.constant 0 : index
    %c2304 = arith.constant 2304 : index
    %136 = vector.load %arg2[%c0_39, %c2304] : memref<2x2816xf32, #tpu.memory_space<vmem>>, vector<2x256xf32>
    tpu.vector_store %arg2[%c0_39, %c2304], %135 {strides = array<i32>} : memref<2x2816xf32, #tpu.memory_space<vmem>>, vector<2x256xf32>,
    %cst_40 = arith.constant 0.000000e+00 : f32
    %137 = vector.broadcast %cst_40 : f32 to vector<2x256xf32>
    %138 = arith.subf %137, %32 : vector<2x256xf32>
    %139 = arith.subf %138, %20 : vector<2x256xf32>
    %cst_41 = arith.constant 5.000000e+00 : f32
    %140 = vector.broadcast %cst_41 : f32 to vector<2x256xf32>
    %141 = arith.mulf %140, %0 : vector<2x256xf32>
    %142 = arith.addf %139, %141 : vector<2x256xf32>
    %143 = arith.subf %142, %26 : vector<2x256xf32>
    %144 = arith.subf %143, %34 : vector<2x256xf32>
    %c0_42 = arith.constant 0 : index
    %c2560 = arith.constant 2560 : index
    %145 = vector.load %arg2[%c0_42, %c2560] : memref<2x2816xf32, #tpu.memory_space<vmem>>, vector<2x256xf32>
    tpu.vector_store %arg2[%c0_42, %c2560], %144 {strides = array<i32>} : memref<2x2816xf32, #tpu.memory_space<vmem>>, vector<2x256xf32>,
    return
  }
  func.func @transform_0(%arg0: i32) -> (i32, i32) {
    %c0_i32 = arith.constant 0 : i32
    %c0_i32_0 = arith.constant 0 : i32
    return %arg0, %c0_i32 : i32, i32
  }
  func.func @transform_1(%arg0: i32) -> (i32, i32) {
    %c0_i32 = arith.constant 0 : i32
    %c0_i32_0 = arith.constant 0 : i32
    return %arg0, %c0_i32 : i32, i32
  }
}

</mosaic_0001>

<llo_original>
// kernel: run.1
$region0: #{run.1}
  #allocation0 [shape = 'u32[]', space=smem, size = 0x4, offset = 0x4, fixed_abs, tag = 'smem constant byte address 0x4 - core index']
  #allocation1 [shape = 'u32[144,128]{1,0:T(1,128)}', space=vmem, size = 0x12000, scoped, tag = 'internal scratch']
  %s0 = inlined_call_operand.hbm [shape: f32[2,256], index: 0, kind: input, shape index: {}]
  %s1 = inlined_call_operand.vmem [shape: f32[2,2816], index: 1, kind: output, shape index: {}]
  %s2 = sld [smem:[#allocation0]]
  $region18: #{run.1} parent=0
    _
  %s4 = ssub.s32 1, %s2
  %s5 = scalar_select 0, %s4, %s2
  $region1: #{run.1} parent=0
    #allocation2 [shape = 'u8[2048]{0}', space=vmem, size = 0x800, scoped, tag = 'input window, operand 0, single buffered']
    #allocation3 [shape = 's32[1]{0}', space=sflag, size = 0x4, scoped, tag = 'scoped memory for run.1']
    %6 = vsyncpa [#allocation3], 0
    // Predicated region
    $region2: #{run.1} parent=1 // pred_check
      _
    $region3: #{run.1} parent=1 // pred_check_branch
      %8 = sbr.rel (0) target = $region5
    $region4: #{run.1} parent=1 // pred_region
      %s10 = ssub.s32 64, 64
      %11 = vsyncadd [#allocation3], %s10
      %s13 = sshll.u32 [#allocation2], 4
      %s14 = int_to_ptr.vmem [resolvable:$true] %s13
      %16 = dma.hbm_to_vmem [thread:$0]  %s0, 64, %s14, [#allocation3]
    $region5: #{run.1} parent=1 // pred_fallthru
      _
    // Predicated region
    $region6: #{run.1} parent=1 // pred_check
      _
    $region7: #{run.1} parent=1 // pred_check_branch
      %18 = sbr.rel (0) target = $region9
    $region8: #{run.1} parent=1 // pred_region
      %19 = dma.done [#allocation3], 64
    $region9: #{run.1} parent=1 // pred_fallthru
      _
    %v20 = vld [vmem:[#allocation2] sm:$0xf]
    %v21 = vlaneseq
    %v22 = vand.u32 %v21, 127
    %v23 = vadd.s32 %v22, 128
    %v24 = vcvt.s32.f32 %v22
    %v25 = vcvt.s32.f32 %v23
    %v26 = vrcp.pop 16.0
    %v27 = vmul.f32 %v24, %v26
    %v28 = vmul.f32 %v25, %v26
    %v29 = vfloor.f32 %v27
    %v30 = vfloor.f32 %v28
    %v31 = vmul.f32 %v29, 16.0
    %v32 = vmul.f32 %v30, 16.0
    %v33 = vsub.f32 %v24, %v31
    %v34 = vsub.f32 %v25, %v32
    %vm35 = vcmp.ge.f32.partialorder %v33, 0.5
    %vm36 = vcmp.ge.f32.partialorder %v34, 0.5
    %vm37 = vcmp.le.f32.partialorder %v33, 14.5
    %vm38 = vcmp.le.f32.partialorder %v34, 14.5
    %v41 = vunpack.c.l.s4 1983009808
    %v42 = vunpack.c.0.s8 %v41
    %v43 = vlaneseq
    %v44 = vshrl.u32 %v43, 7
    %v45 = vsub.s32 %v42, %v44
    %v46 = vrot.slane %v20, %v45
    %v47 = vcombine.high %v46, %v46
    %48 = vrot.lane.b32.xlu0 %v46, 1
    %v49 = vpop.permute.xlu0 %48
    %50 = vrot.lane.b32.xlu0 %v47, 1
    %v51 = vpop.permute.xlu0 %50
    %vm52 = vcmask 7168
    %v53 = vsel %vm52, %v49, %v51
    %v56 = vsel %vm52, 0.0, %v49
    %v57 = vsel %vm35, 1, 0
    %v58 = vsel %vm36, 1, 0
    %vm59 = vcmp.eq.s32.totalorder %v57, 1
    %vm60 = vcmp.eq.s32.totalorder %v58, 1
    %v61 = vsel %vm59, %v56, 0.0
    %v62 = vsel %vm60, %v53, 0.0
    %63 = vrot.lane.b32.xlu0 %v46, 127
    %v64 = vpop.permute.xlu0 %63
    %65 = vrot.lane.b32.xlu0 %v47, 127
    %v66 = vpop.permute.xlu0 %65
    %vm67 = vcmask 1039360
    %v68 = vsel %vm67, %v64, %v66
    %v71 = vsel %vm67, %v66, 0.0
    %v72 = vsel %vm37, 1, 0
    %v73 = vsel %vm38, 1, 0
    %vm74 = vcmp.eq.s32.totalorder %v72, 1
    %vm75 = vcmp.eq.s32.totalorder %v73, 1
    %v76 = vsel %vm74, %v68, 0.0
    %v77 = vsel %vm75, %v71, 0.0
    %80 = vrot.lane.b32.xlu0 %v61, 16
    %v81 = vpop.permute.xlu0 %80
    %82 = vrot.lane.b32.xlu0 %v62, 16
    %v83 = vpop.permute.xlu0 %82
    %vm84 = vcmask 130048
    %v85 = vsel %vm84, %v81, %v83
    %v88 = vsel %vm84, 0.0, %v81
    %89 = vrot.lane.b32.xlu0 %v61, 112
    %v90 = vpop.permute.xlu0 %89
    %91 = vrot.lane.b32.xlu0 %v62, 112
    %v92 = vpop.permute.xlu0 %91
    %vm93 = vcmask 916480
    %v94 = vsel %vm93, %v90, %v92
    %v97 = vsel %vm93, %v92, 0.0
    %98 = vrot.lane.b32.xlu0 %v46, 16
    %v99 = vpop.permute.xlu0 %98
    %100 = vrot.lane.b32.xlu0 %v47, 16
    %v101 = vpop.permute.xlu0 %100
    %v102 = vsel %vm84, %v99, %v101
    %v105 = vsel %vm84, 0.0, %v99
    %106 = vrot.lane.b32.xlu0 %v46, 112
    %v107 = vpop.permute.xlu0 %106
    %108 = vrot.lane.b32.xlu0 %v47, 112
    %v109 = vpop.permute.xlu0 %108
    %v110 = vsel %vm93, %v107, %v109
    %v113 = vsel %vm93, %v109, 0.0
    %116 = vrot.lane.b32.xlu0 %v76, 16
    %v117 = vpop.permute.xlu0 %116
    %118 = vrot.lane.b32.xlu0 %v77, 16
    %v119 = vpop.permute.xlu0 %118
    %v120 = vsel %vm84, %v117, %v119
    %v123 = vsel %vm84, 0.0, %v117
    %124 = vrot.lane.b32.xlu0 %v76, 112
    %v125 = vpop.permute.xlu0 %124
    %126 = vrot.lane.b32.xlu0 %v77, 112
    %v127 = vpop.permute.xlu0 %126
    %v128 = vsel %vm93, %v125, %v127
    %v131 = vsel %vm93, %v127, 0.0
    %132 = vst [vmem:[%s1] sm:$0xf] %v20
    %133 = vst [vmem:[%s1 + $0x4] sm:$0xf] %v20
    %v134 = vmul.f32 %v88, 0.11111111
    %v135 = vmul.f32 %v85, 0.11111111
    %v136 = vmul.f32 %v105, 0.11111111
    %v137 = vmul.f32 %v102, 0.11111111
    %v138 = vadd.f32 %v134, %v136
    %v139 = vadd.f32 %v135, %v137
    %v140 = vmul.f32 %v123, 0.11111111
    %v141 = vmul.f32 %v120, 0.11111111
    %v142 = vadd.f32 %v138, %v140
    %v143 = vadd.f32 %v139, %v141
    %v144 = vmul.f32 %v61, 0.11111111
    %v145 = vmul.f32 %v62, 0.11111111
    %v146 = vadd.f32 %v142, %v144
    %v147 = vadd.f32 %v143, %v145
    %v148 = vmul.f32 %v20, 0.11111111
    %v151 = vunpack.c.l.s4 1983009808
    %v152 = vunpack.c.0.s8 %v151
    %v153 = vlaneseq
    %v154 = vshrl.u32 %v153, 7
    %v155 = vsub.s32 %v152, %v154
    %v156 = vrot.slane %v148, %v155
    %v157 = vcombine.high %v156, %v156
    %v160 = vadd.f32 %v146, %v156
    %v161 = vadd.f32 %v147, %v157
    %v162 = vmul.f32 %v76, 0.11111111
    %v163 = vmul.f32 %v77, 0.11111111
    %v164 = vadd.f32 %v160, %v162
    %v165 = vadd.f32 %v161, %v163
    %v166 = vmul.f32 %v94, 0.11111111
    %v167 = vmul.f32 %v97, 0.11111111
    %v168 = vadd.f32 %v164, %v166
    %v169 = vadd.f32 %v165, %v167
    %v170 = vmul.f32 %v110, 0.11111111
    %v171 = vmul.f32 %v113, 0.11111111
    %v172 = vadd.f32 %v168, %v170
    %v173 = vadd.f32 %v169, %v171
    %v174 = vmul.f32 %v128, 0.11111111
    %v175 = vmul.f32 %v131, 0.11111111
    %v176 = vadd.f32 %v172, %v174
    %v177 = vadd.f32 %v173, %v175
    %v180 = vcombine.low %v176, %v177
    %v182 = vunpack.c.l.s4 1983009808
    %v183 = vunpack.c.0.s8 %v182
    %v184 = vlaneseq
    %v185 = vshrl.u32 %v184, 7
    %v186 = vsub.s32 %v183, %v185
    %v187 = vrot.slane %v180, %v186
    %189 = vst [vmem:[%s1 + $0x8] sm:$0xf] %v187
    %v190 = vsub.f32 0.0, %v88
    %v191 = vsub.f32 0.0, %v85
    %v192 = vadd.f32 %v190, %v123
    %v193 = vadd.f32 %v191, %v120
    %v194 = vmul.f32 %v61, -2.0
    %v195 = vmul.f32 %v62, -2.0
    %v196 = vadd.f32 %v192, %v194
    %v197 = vadd.f32 %v193, %v195
    %v198 = vmul.f32 %v76, 2.0
    %v199 = vmul.f32 %v77, 2.0
    %v200 = vadd.f32 %v196, %v198
    %v201 = vadd.f32 %v197, %v199
    %v202 = vsub.f32 %v200, %v94
    %v203 = vsub.f32 %v201, %v97
    %v204 = vadd.f32 %v202, %v128
    %v205 = vadd.f32 %v203, %v131
    %v208 = vcombine.low %v204, %v205
    %v210 = vunpack.c.l.s4 1983009808
    %v211 = vunpack.c.0.s8 %v210
    %v212 = vlaneseq
    %v213 = vshrl.u32 %v212, 7
    %v214 = vsub.s32 %v211, %v213
    %v215 = vrot.slane %v208, %v214
    %217 = vst [vmem:[%s1 + $0xc] sm:$0xf] %v215
    %v218 = vmul.f32 %v105, -2.0
    %v219 = vmul.f32 %v102, -2.0
    %v220 = vadd.f32 %v190, %v218
    %v221 = vadd.f32 %v191, %v219
    %v222 = vsub.f32 %v220, %v123
    %v223 = vsub.f32 %v221, %v120
    %v224 = vadd.f32 %v222, %v94
    %v225 = vadd.f32 %v223, %v97
    %v226 = vmul.f32 %v110, 2.0
    %v227 = vmul.f32 %v113, 2.0
    %v228 = vadd.f32 %v224, %v226
    %v229 = vadd.f32 %v225, %v227
    %v230 = vadd.f32 %v228, %v128
    %v231 = vadd.f32 %v229, %v131
    %v234 = vcombine.low %v230, %v231
    %v236 = vunpack.c.l.s4 1983009808
    %v237 = vunpack.c.0.s8 %v236
    %v238 = vlaneseq
    %v239 = vshrl.u32 %v238, 7
    %v240 = vsub.s32 %v237, %v239
    %v241 = vrot.slane %v234, %v240
    %243 = vst [vmem:[%s1 + $0x10] sm:$0xf] %v241
    %v244 = vsub.f32 %v192, %v61
    %v245 = vsub.f32 %v193, %v62
    %v246 = vadd.f32 %v244, %v76
    %v247 = vadd.f32 %v245, %v77
    %v248 = vsub.f32 %v246, %v94
    %v249 = vsub.f32 %v247, %v97
    %v250 = vadd.f32 %v248, %v128
    %v251 = vadd.f32 %v249, %v131
    %v254 = vcombine.low %v250, %v251
    %v256 = vunpack.c.l.s4 1983009808
    %v257 = vunpack.c.0.s8 %v256
    %v258 = vlaneseq
    %v259 = vshrl.u32 %v258, 7
    %v260 = vsub.s32 %v257, %v259
    %v261 = vrot.slane %v254, %v260
    %263 = vst [vmem:[%s1 + $0x14] sm:$0xf] %v261
    %v264 = vsub.f32 %v190, %v105
    %v265 = vsub.f32 %v191, %v102
    %v266 = vsub.f32 %v264, %v123
    %v267 = vsub.f32 %v265, %v120
    %v268 = vadd.f32 %v266, %v94
    %v269 = vadd.f32 %v267, %v97
    %v270 = vadd.f32 %v268, %v110
    %v271 = vadd.f32 %v269, %v113
    %v272 = vadd.f32 %v270, %v128
    %v273 = vadd.f32 %v271, %v131
    %v276 = vcombine.low %v272, %v273
    %v278 = vunpack.c.l.s4 1983009808
    %v279 = vunpack.c.0.s8 %v278
    %v280 = vlaneseq
    %v281 = vshrl.u32 %v280, 7
    %v282 = vsub.s32 %v279, %v281
    %v283 = vrot.slane %v276, %v282
    %285 = vst [vmem:[%s1 + $0x18] sm:$0xf] %v283
    %v286 = vadd.f32 %v105, %v61
    %v287 = vadd.f32 %v102, %v62
    %v288 = vmul.f32 %v20, -4.0
    %v291 = vunpack.c.l.s4 1983009808
    %v292 = vunpack.c.0.s8 %v291
    %v293 = vlaneseq
    %v294 = vshrl.u32 %v293, 7
    %v295 = vsub.s32 %v292, %v294
    %v296 = vrot.slane %v288, %v295
    %v297 = vcombine.high %v296, %v296
    %v300 = vadd.f32 %v286, %v296
    %v301 = vadd.f32 %v287, %v297
    %v302 = vadd.f32 %v300, %v76
    %v303 = vadd.f32 %v301, %v77
    %v304 = vadd.f32 %v302, %v110
    %v305 = vadd.f32 %v303, %v113
    %v308 = vcombine.low %v304, %v305
    %v310 = vunpack.c.l.s4 1983009808
    %v311 = vunpack.c.0.s8 %v310
    %v312 = vlaneseq
    %v313 = vshrl.u32 %v312, 7
    %v314 = vsub.s32 %v311, %v313
    %v315 = vrot.slane %v308, %v314
    %317 = vst [vmem:[%s1 + $0x1c] sm:$0xf] %v315
    %v318 = vadd.f32 %v88, %v105
    %v319 = vadd.f32 %v85, %v102
    %v320 = vadd.f32 %v318, %v123
    %v321 = vadd.f32 %v319, %v120
    %v322 = vadd.f32 %v320, %v61
    %v323 = vadd.f32 %v321, %v62
    %v324 = vmul.f32 %v20, -8.0
    %v327 = vunpack.c.l.s4 1983009808
    %v328 = vunpack.c.0.s8 %v327
    %v329 = vlaneseq
    %v330 = vshrl.u32 %v329, 7
    %v331 = vsub.s32 %v328, %v330
    %v332 = vrot.slane %v324, %v331
    %v333 = vcombine.high %v332, %v332
    %v336 = vadd.f32 %v322, %v332
    %v337 = vadd.f32 %v323, %v333
    %v338 = vadd.f32 %v336, %v76
    %v339 = vadd.f32 %v337, %v77
    %v340 = vadd.f32 %v338, %v94
    %v341 = vadd.f32 %v339, %v97
    %v342 = vadd.f32 %v340, %v110
    %v343 = vadd.f32 %v341, %v113
    %v344 = vadd.f32 %v342, %v128
    %v345 = vadd.f32 %v343, %v131
    %v348 = vcombine.low %v344, %v345
    %v350 = vunpack.c.l.s4 1983009808
    %v351 = vunpack.c.0.s8 %v350
    %v352 = vlaneseq
    %v353 = vshrl.u32 %v352, 7
    %v354 = vsub.s32 %v351, %v353
    %v355 = vrot.slane %v348, %v354
    %357 = vst [vmem:[%s1 + $0x20] sm:$0xf] %v355
    %v358 = vmul.f32 %v88, -2.0
    %v359 = vmul.f32 %v85, -2.0
    %v360 = vsub.f32 %v358, %v105
    %v361 = vsub.f32 %v359, %v102
    %v362 = vsub.f32 %v360, %v61
    %v363 = vsub.f32 %v361, %v62
    %v366 = vadd.f32 %v362, %v46
    %v367 = vadd.f32 %v363, %v47
    %v368 = vadd.f32 %v366, %v76
    %v369 = vadd.f32 %v367, %v77
    %v370 = vadd.f32 %v368, %v110
    %v371 = vadd.f32 %v369, %v113
    %v372 = vmul.f32 %v128, 2.0
    %v373 = vmul.f32 %v131, 2.0
    %v374 = vadd.f32 %v370, %v372
    %v375 = vadd.f32 %v371, %v373
    %v378 = vcombine.low %v374, %v375
    %v380 = vunpack.c.l.s4 1983009808
    %v381 = vunpack.c.0.s8 %v380
    %v382 = vlaneseq
    %v383 = vshrl.u32 %v382, 7
    %v384 = vsub.s32 %v381, %v383
    %v385 = vrot.slane %v378, %v384
    %387 = vst [vmem:[%s1 + $0x24] sm:$0xf] %v385
    %v388 = vsub.f32 0.0, %v105
    %v389 = vsub.f32 0.0, %v102
    %v390 = vsub.f32 %v388, %v61
    %v391 = vsub.f32 %v389, %v62
    %v392 = vmul.f32 %v20, 5.0
    %v395 = vunpack.c.l.s4 1983009808
    %v396 = vunpack.c.0.s8 %v395
    %v397 = vlaneseq
    %v398 = vshrl.u32 %v397, 7
    %v399 = vsub.s32 %v396, %v398
    %v400 = vrot.slane %v392, %v399
    %v401 = vcombine.high %v400, %v400
    %v404 = vadd.f32 %v390, %v400
    %v405 = vadd.f32 %v391, %v401
    %v406 = vsub.f32 %v404, %v76
    %v407 = vsub.f32 %v405, %v77
    %v408 = vsub.f32 %v406, %v110
    %v409 = vsub.f32 %v407, %v113
    %v412 = vcombine.low %v408, %v409
    %v414 = vunpack.c.l.s4 1983009808
    %v415 = vunpack.c.0.s8 %v414
    %v416 = vlaneseq
    %v417 = vshrl.u32 %v416, 7
    %v418 = vsub.s32 %v415, %v417
    %v419 = vrot.slane %v412, %v418
    %421 = vst [vmem:[%s1 + $0x28] sm:$0xf] %v419
    // Predicated region
    $region10: #{run.1} parent=1 // pred_check
      _
    $region11: #{run.1} parent=1 // pred_check_branch
      %423 = sbr.rel (0) target = $region13
    $region12: #{run.1} parent=1 // pred_region
      _
    $region13: #{run.1} parent=1 // pred_fallthru
      _
    // Predicated region
    $region14: #{run.1} parent=1 // pred_check
      _
    $region15: #{run.1} parent=1 // pred_check_branch
      %425 = sbr.rel (0) target = $region17
    $region16: #{run.1} parent=1 // pred_region
      _
    $region17: #{run.1} parent=1 // pred_fallthru
      _
    %426 = vsyncpa [#allocation3], 1

</llo_original>
